<compile_context>
chip_gen: v6e
topology: v6e:2x2x1
jax: 0.10.0
libtpu: 0.0.40
codegen_flags: <defaults>
</compile_context>

<pallas_src>
import functools
import math

import jax
import jax.numpy as jnp
from jax.experimental import pallas as pl
from jax.experimental.pallas import tpu as pltpu


def _round_up(x, m):
    return ((x + m - 1) // m) * m


def _residualconv_kernel(dilation, padding, x_ref, wc_ref, bc_ref, wf_ref,
                         bf_ref, o_ref):
    # x_ref:  (1, 1, C, TTH) bf16  channel-major input window (with halo)
    # wc_ref: (C, K*C)       bf16  im2col conv weight: W[co, k*C + ci]
    # bc_ref: (C, 1)         f32   conv bias
    # wf_ref: (C, C)         bf16  fc weight, PyTorch (out, in) layout
    # bf_ref: (C, 1)         f32   fc bias
    # o_ref:  (1, C, TT)           channel-major output tile
    C = o_ref.shape[1]
    TT = o_ref.shape[2]
    K = wc_ref.shape[1] // C

    slab = x_ref[0, 0]                                        # (C, TTH) bf16

    # Dilated conv as ONE (K*C)-deep MXU matmul on an in-register im2col.
    taps = [slab[:, k * dilation:k * dilation + TT] for k in range(K)]
    im2col = jnp.concatenate(taps, axis=0)                    # (K*C, TT) bf16
    acc = jnp.dot(wc_ref[...], im2col,
                  preferred_element_type=jnp.float32)         # (C, TT) f32
    h = jnp.maximum(acc + bc_ref[...], 0.0)                   # bias + ReLU

    # Per-timestep Linear(128, 128).
    y = jnp.dot(wf_ref[...], h.astype(wf_ref.dtype),
                preferred_element_type=jnp.float32) + bf_ref[...]

    # Residual from the same resident window (bf16-rounded; no extra HBM
    # stream), fused add + sqrt(0.5) scale + cast.
    res = slab[:, padding:padding + TT].astype(jnp.float32)
    o_ref[0] = ((y + res) * math.sqrt(0.5)).astype(o_ref.dtype)


def residual_conv_module(x, conv_v, conv_g, conv_b, fc_w, fc_b, *,
                         stride=1, padding=2, dilation=1,
                         c=None, g=None, tile_t=1024, out_dtype=jnp.float32):
    """Forward pass of residualconvmodule (batch path).

    x:       (B, C, T) float32, channel-major (PyTorch layout)
    conv_v:  (C, C, K) weight_norm 'v' of the Conv1d weight
    conv_g:  (C,)      weight_norm 'g' (per output channel)
    conv_b:  (C,)      conv bias
    fc_w:    (C, C)    Linear weight, PyTorch layout (out, in)
    fc_b:    (C,)      Linear bias
    c, g: conditioning inputs -- unused by the reference forward.
    """
    del c, g  # never used in the reference _forward
    B, C, T = x.shape
    Co, Ci, K = conv_v.shape
    assert Ci == C and Co == C, "residual add requires in_channels == out_channels"
    assert fc_w.shape == (C, C)
    assert stride == 1, "stride must be 1 for the residual shapes to match"
    halo = (K - 1) * dilation
    assert 2 * padding >= halo, "conv output shorter than input"
    ext = max(halo, padding)

    # --- weight preparation (done once, outside the kernel) ---
    # weight_norm (dim=0): w = g * v / ||v||, norm per output channel.
    vf = conv_v.astype(jnp.float32)
    norm = jnp.sqrt(jnp.sum(vf ** 2, axis=(1, 2), keepdims=True))
    w_eff = conv_g.reshape(Co, 1, 1).astype(jnp.float32) * vf / norm  # (Co,Ci,K)
    # im2col layout: W_cat[co, k*Ci + ci] = w_eff[co, ci, k]
    w_cat = jnp.transpose(w_eff, (0, 2, 1)).reshape(Co, K * Ci).astype(jnp.bfloat16)
    wf = fc_w.astype(jnp.bfloat16)                      # PyTorch (out, in): y = W @ h
    bc = conv_b.reshape(Co, 1).astype(jnp.float32)
    bf = fc_b.reshape(Co, 1).astype(jnp.float32)

    # --- time tiling: TT multiple of 128 so output lane dim is dense ---
    TT = _round_up(min(max(tile_t, 1), T), 128)
    n_t = pl.cdiv(T, TT)
    T_round = n_t * TT
    TTH = TT + ext                    # window length incl. conv halo / residual offset
    Lp = T_round + ext                # padded time length

    # Pad (left = conv padding, right = tail zeros) and gather overlapping
    # per-tile windows in bf16.  One fused XLA pass; no activation transpose.
    xb = x.astype(jnp.bfloat16)
    xp = jnp.pad(xb, ((0, 0), (0, 0), (padding, Lp - padding - T)))
    idx = jnp.arange(n_t)[:, None] * TT + jnp.arange(TTH)[None, :]   # (n_t, TTH)
    x_win = jnp.transpose(xp[:, :, idx], (0, 2, 1, 3))               # (B, n_t, C, TTH)

    flops = 2 * B * T_round * Ci * Co * (K + 1)
    out_bytes = B * Co * T_round * jnp.dtype(out_dtype).itemsize
    bytes_accessed = int(x_win.size * 2 + out_bytes
                         + w_cat.size * 2 + wf.size * 2 + 2 * Co * 4)

    out = pl.pallas_call(
        functools.partial(_residualconv_kernel, dilation, padding),
        out_shape=jax.ShapeDtypeStruct((B, Co, T_round), out_dtype),
        grid=(B, n_t),
        in_specs=[
            # per-tile halo window: streamed + double-buffered per grid step
            pl.BlockSpec((1, 1, C, TTH), lambda b, i: (b, i, 0, 0)),
            # weights / biases: block index constant -> VMEM-resident across grid
            pl.BlockSpec((Co, K * Ci), lambda b, i: (0, 0)),
            pl.BlockSpec((Co, 1), lambda b, i: (0, 0)),
            pl.BlockSpec((Co, Ci), lambda b, i: (0, 0)),
            pl.BlockSpec((Co, 1), lambda b, i: (0, 0)),
        ],
        out_specs=pl.BlockSpec((1, Co, TT), lambda b, i: (b, 0, i)),
        compiler_params=pltpu.CompilerParams(
            dimension_semantics=("parallel", "parallel"),
            vmem_limit_bytes=32 * 1024 * 1024),
        cost_estimate=pl.CostEstimate(
            flops=flops, transcendentals=0, bytes_accessed=bytes_accessed),
    )(x_win, w_cat, bc, wf, bf)

    return out[:, :, :T]                                  # (B, C, T)


def _reference(x, conv_v, conv_g, conv_b, fc_w, fc_b, *, padding, dilation):
    """Pure-JAX reference mirroring the kernel numerics (bf16 conv/fc/residual
    inputs, f32 accumulation)."""
    B, C, T = x.shape
    Co, Ci, K = conv_v.shape
    vf = conv_v.astype(jnp.float32)
    norm = jnp.sqrt(jnp.sum(vf ** 2, axis=(1, 2), keepdims=True))
    w = conv_g.reshape(Co, 1, 1).astype(jnp.float32) * vf / norm      # (Co, Ci, K)

    halo = (K - 1) * dilation
    xb = x.astype(jnp.bfloat16)
    xp = jnp.pad(xb, ((0, 0), (0, 0), (padding, max(0, halo - padding))))

    acc = jnp.zeros((B, Co, T), jnp.float32)
    for k in range(K):
        xk = xp[:, :, k * dilation:k * dilation + T]                  # (B, Ci, T)
        wk = w[:, :, k].astype(jnp.bfloat16)                          # (Co, Ci)
        acc = acc + jnp.einsum('oc,bct->bot', wk, xk,
                               preferred_element_type=jnp.float32)
    h = jnp.maximum(acc + conv_b.reshape(1, Co, 1), 0.0)
    y = jnp.einsum('oc,bct->bot', fc_w.astype(jnp.bfloat16),
                   h.astype(jnp.bfloat16),
                   preferred_element_type=jnp.float32) + fc_b.reshape(1, Co, 1)
    return (y + xb.astype(jnp.float32)) * math.sqrt(0.5)


if __name__ == "__main__":
    # Small shapes consistent with the module: Linear(128,128) fixes C=128.
    B, C, T = 2, 128, 256
    K, stride, padding, dilation = 3, 1, 2, 1

    key = jax.random.PRNGKey(0)
    kx, kv, kb, kfw, kfb = jax.random.split(key, 5)

    x = jax.random.normal(kx, (B, C, T), jnp.float32)
    std = math.sqrt(1.0 / (K * C))
    conv_v = std * jax.random.normal(kv, (C, C, K), jnp.float32)
    conv_g = jnp.sqrt(jnp.sum(conv_v ** 2, axis=(1, 2)))   # weight_norm init: g = ||v||
    conv_b = 0.01 * jax.random.normal(kb, (C,), jnp.float32)
    bound = 1.0 / math.sqrt(C)
    fc_w = jax.random.uniform(kfw, (C, C), jnp.float32, -bound, bound)
    fc_b = jax.random.uniform(kfb, (C,), jnp.float32, -bound, bound)

    fwd = jax.jit(functools.partial(
        residual_conv_module, stride=stride, padding=padding,
        dilation=dilation, tile_t=128))   # small tile so the demo runs a (2, 2) grid
    y = fwd(x, conv_v, conv_g, conv_b, fc_w, fc_b)
    jax.block_until_ready(y)

    ref = _reference(x, conv_v, conv_g, conv_b, fc_w, fc_b,
                     padding=padding, dilation=dilation)

    assert y.shape == x.shape == (B, C, T)
    assert bool(jnp.allclose(y, ref, atol=2e-3, rtol=2e-3))

    print("KERNEL_OK")
</pallas_src>

<mosaic_0001>
module attributes {stable_mosaic.version = 11 : i64} {
  func.func @_residualconv_kernel(%arg0: i32, %arg1: i32, %arg2: memref<1x1x128x130xbf16, #tpu.memory_space<vmem>>, %arg3: memref<128x384xbf16, #tpu.memory_space<vmem>>, %arg4: memref<128x1xf32, #tpu.memory_space<vmem>>, %arg5: memref<128x128xbf16, #tpu.memory_space<vmem>>, %arg6: memref<128x1xf32, #tpu.memory_space<vmem>>, %arg7: memref<1x128x128xf32, #tpu.memory_space<vmem>>) attributes {dimension_semantics = [#tpu.dimension_semantics<parallel>, #tpu.dimension_semantics<parallel>], iteration_bounds = array<i64: 2, 2>, scalar_prefetch = 0 : i64, scratch_operands = 0 : i64, tpu.core_type = #tpu.core_type<tc>, window_params = [{transform_indices = @transform_0, window_bounds = array<i64: 1, 1, 128, 130>}, {pipeline_mode = #tpu.pipeline_mode<synchronous>, transform_indices = @transform_1, window_bounds = array<i64: 128, 384>}, {pipeline_mode = #tpu.pipeline_mode<synchronous>, transform_indices = @transform_2, window_bounds = array<i64: 128, 1>}, {pipeline_mode = #tpu.pipeline_mode<synchronous>, transform_indices = @transform_3, window_bounds = array<i64: 128, 128>}, {pipeline_mode = #tpu.pipeline_mode<synchronous>, transform_indices = @transform_4, window_bounds = array<i64: 128, 1>}, {transform_indices = @transform_5, window_bounds = array<i64: 1, 128, 128>}]} {
    %c0 = arith.constant 0 : index
    %c0_0 = arith.constant 0 : index
    %c0_1 = arith.constant 0 : index
    %c0_2 = arith.constant 0 : index
    %0 = vector.load %arg2[%c0, %c0_0, %c0_1, %c0_2] : memref<1x1x128x130xbf16, #tpu.memory_space<vmem>>, vector<1x1x128x130xbf16>
    %1 = vector.shape_cast %0 : vector<1x1x128x130xbf16> to vector<128x130xbf16>
    %2 = vector.extract_strided_slice %1 {offsets = [0, 0], sizes = [128, 128], strides = [1, 1]} : vector<128x130xbf16> to vector<128x128xbf16>
    %3 = vector.extract_strided_slice %1 {offsets = [0, 1], sizes = [128, 128], strides = [1, 1]} : vector<128x130xbf16> to vector<128x128xbf16>
    %4 = vector.extract_strided_slice %1 {offsets = [0, 2], sizes = [128, 128], strides = [1, 1]} : vector<128x130xbf16> to vector<128x128xbf16>
    %5 = tpu.concatenate %2, %3, %4 in 0 : vector<128x128xbf16>, vector<128x128xbf16>, vector<128x128xbf16> -> vector<384x128xbf16>
    %c0_3 = arith.constant 0 : index
    %c0_4 = arith.constant 0 : index
    %6 = vector.load %arg3[%c0_3, %c0_4] : memref<128x384xbf16, #tpu.memory_space<vmem>>, vector<128x384xbf16>
    %cst = arith.constant dense<0.000000e+00> : vector<128x128xf32>
    %7 = tpu.matmul %6, %5, %cst {dimension_numbers = #tpu.dot_dimension_numbers<[1], [0], [0], [1], [0, 0, 1, 1], [], []>} : vector<128x384xbf16>, vector<384x128xbf16>, vector<128x128xf32> -> vector<128x128xf32>
    %c0_5 = arith.constant 0 : index
    %c0_6 = arith.constant 0 : index
    %8 = vector.load %arg4[%c0_5, %c0_6] : memref<128x1xf32, #tpu.memory_space<vmem>>, vector<128x1xf32>
    %9 = vector.broadcast %8 : vector<128x1xf32> to vector<128x128xf32>
    %10 = arith.addf %7, %9 : vector<128x128xf32>
    %cst_7 = arith.constant 0.000000e+00 : f32
    %11 = vector.broadcast %cst_7 : f32 to vector<128x128xf32>
    %12 = arith.maximumf %10, %11 : vector<128x128xf32>
    %c0_8 = arith.constant 0 : index
    %c0_9 = arith.constant 0 : index
    %13 = vector.load %arg5[%c0_8, %c0_9] : memref<128x128xbf16, #tpu.memory_space<vmem>>, vector<128x128xbf16>
    %14 = arith.truncf %12 : vector<128x128xf32> to vector<128x128xbf16>
    %cst_10 = arith.constant dense<0.000000e+00> : vector<128x128xf32>
    %15 = tpu.matmul %13, %14, %cst_10 {dimension_numbers = #tpu.dot_dimension_numbers<[1], [0], [0], [1], [0, 0, 1, 1], [], []>} : vector<128x128xbf16>, vector<128x128xbf16>, vector<128x128xf32> -> vector<128x128xf32>
    %c0_11 = arith.constant 0 : index
    %c0_12 = arith.constant 0 : index
    %16 = vector.load %arg6[%c0_11, %c0_12] : memref<128x1xf32, #tpu.memory_space<vmem>>, vector<128x1xf32>
    %17 = vector.broadcast %16 : vector<128x1xf32> to vector<128x128xf32>
    %18 = arith.addf %15, %17 : vector<128x128xf32>
    %19 = vector.extract_strided_slice %1 {offsets = [0, 2], sizes = [128, 128], strides = [1, 1]} : vector<128x130xbf16> to vector<128x128xbf16>
    %20 = arith.extf %19 : vector<128x128xbf16> to vector<128x128xf32>
    %21 = arith.addf %18, %20 : vector<128x128xf32>
    %cst_13 = arith.constant 0.707106769 : f32
    %22 = vector.broadcast %cst_13 : f32 to vector<128x128xf32>
    %23 = arith.mulf %21, %22 : vector<128x128xf32>
    %c0_14 = arith.constant 0 : index
    %c0_15 = arith.constant 0 : index
    %c0_16 = arith.constant 0 : index
    %24 = vector.load %arg7[%c0_14, %c0_15, %c0_16] : memref<1x128x128xf32, #tpu.memory_space<vmem>>, vector<1x128x128xf32>
    %25 = vector.shape_cast %24 : vector<1x128x128xf32> to vector<128x128xf32>
    %26 = vector.shape_cast %23 : vector<128x128xf32> to vector<1x128x128xf32>
    tpu.vector_store %arg7[%c0_14, %c0_15, %c0_16], %26 {strides = array<i32>} : memref<1x128x128xf32, #tpu.memory_space<vmem>>, vector<1x128x128xf32>,
    return
  }
  func.func @transform_0(%arg0: i32, %arg1: i32) -> (i32, i32, i32, i32) {
    %c0_i32 = arith.constant 0 : i32
    %c0_i32_0 = arith.constant 0 : i32
    %c0_i32_1 = arith.constant 0 : i32
    return %arg0, %arg1, %c0_i32, %c0_i32_0 : i32, i32, i32, i32
  }
  func.func @transform_1(%arg0: i32, %arg1: i32) -> (i32, i32) {
    %c0_i32 = arith.constant 0 : i32
    %c0_i32_0 = arith.constant 0 : i32
    %c0_i32_1 = arith.constant 0 : i32
    return %c0_i32, %c0_i32_0 : i32, i32
  }
  func.func @transform_2(%arg0: i32, %arg1: i32) -> (i32, i32) {
    %c0_i32 = arith.constant 0 : i32
    %c0_i32_0 = arith.constant 0 : i32
    %c0_i32_1 = arith.constant 0 : i32
    return %c0_i32, %c0_i32_0 : i32, i32
  }
  func.func @transform_3(%arg0: i32, %arg1: i32) -> (i32, i32) {
    %c0_i32 = arith.constant 0 : i32
    %c0_i32_0 = arith.constant 0 : i32
    %c0_i32_1 = arith.constant 0 : i32
    return %c0_i32, %c0_i32_0 : i32, i32
  }
  func.func @transform_4(%arg0: i32, %arg1: i32) -> (i32, i32) {
    %c0_i32 = arith.constant 0 : i32
    %c0_i32_0 = arith.constant 0 : i32
    %c0_i32_1 = arith.constant 0 : i32
    return %c0_i32, %c0_i32_0 : i32, i32
  }
  func.func @transform_5(%arg0: i32, %arg1: i32) -> (i32, i32, i32) {
    %c0_i32 = arith.constant 0 : i32
    %c0_i32_0 = arith.constant 0 : i32
    return %arg0, %c0_i32, %arg1 : i32, i32, i32
  }
}

</mosaic_0001>

<llo_original>
// kernel: residual_conv_module.1
$region0: #{residual_conv_module.1}
  #allocation0 [shape = 'u32[]', space=smem, size = 0x4, offset = 0x4, fixed_abs, tag = 'smem constant byte address 0x4 - core index']
  #allocation1 [shape = 'u32[144,128]{1,0:T(1,128)}', space=vmem, size = 0x12000, scoped, tag = 'internal scratch']
  %s0 = inlined_call_operand.vmem [shape: bf16[2,2,128,130], index: 0, kind: input, shape index: {}]
  %s1 = inlined_call_operand.vmem [shape: bf16[128,384], index: 1, kind: input, shape index: {}]
  %s2 = inlined_call_operand.vmem [shape: f32[128,1], index: 2, kind: input, shape index: {}]
  %s3 = inlined_call_operand.vmem [shape: bf16[128,128], index: 3, kind: input, shape index: {}]
  %s4 = inlined_call_operand.vmem [shape: f32[128,1], index: 4, kind: input, shape index: {}]
  %s5 = inlined_call_operand.hbm [shape: f32[2,128,256], index: 5, kind: output, shape index: {}]
  %s6 = sld [smem:[#allocation0]]
  $region53: #{residual_conv_module.1} parent=0
    _
  %s8 = ssub.s32 1, %s6
  %s9 = scalar_select 0, %s8, %s6
  $region1: #{residual_conv_module.1} parent=0
    #allocation2 [shape = 'u8[131072]{0}', space=vmem, size = 0x20000, scoped, tag = 'output window, operand 0']
    #allocation3 [shape = 's32[2]{0}', space=sflag, size = 0x8, scoped, tag = 'scoped memory for residual_conv_module.1']
    %10 = vsyncpa [#allocation3], 0
    %s11 = scalar_lea.sflag [#allocation3], 1
    %12 = vsyncpa %s11, 0
    loop: start=0, step=1, limit=6
    $region2: #{residual_conv_module.1} parent=1 // loop_pre_header
      _
    $region3: #{residual_conv_module.1} parent=1 // loop_header
      %s14 = sphi 0, %s18
      %p15 = scmp.ge.s32.totalorder %s14, 6
      %s21 = sphi 0, %s33
      %s22 = sphi 0, %s29
      %s23 = sphi 0, %s21
      %s24 = sphi 0, %s22
      %s25 = sphi 0, %s23
      %s26 = sphi 0, %s24
      %s38 = sphi 0, %s40
      %s41 = sphi 0, %s38
      %s42 = sphi 0, %s41
      %s58 = sphi 0, %s42
      %s62 = sphi 0, %s62
      %s64 = sphi 0, %s62
      %s65 = sphi 0, %s64
      %s79 = sphi 0, %s65
      %s83 = sphi 0, %s83
      %s85 = sphi 0, %s83
      %s86 = sphi 0, %s85
      %s100 = sphi 0, %s86
      %s104 = sphi 0, %s104
      %s106 = sphi 0, %s104
      %s107 = sphi 0, %s106
      %s121 = sphi 0, %s107
      %s125 = sphi 0, %s125
      %s127 = sphi 0, %s125
      %s128 = sphi 0, %s127
      %s142 = sphi 0, %s128
      %s150 = sphi 0, %s152
      %s153 = sphi 0, %s150
      %s154 = sphi 0, %s153
      %s170 = sphi 0, %s154
    $region4: #{residual_conv_module.1} parent=1 // loop_header_branch
      %17 = sbr.rel (%p15) target = $region8
    $region5: #{residual_conv_module.1} parent=1 // loop_body
      %s19 = ssub.s32 %s14, 1
      %s20 = ssub.s32 %s14, 2
      %s27 = sadd.s32 1, %s22
      %p28 = scmp.ge.s32.totalorder %s27, 2
      %s29 = scalar_select %p28, 0, %s27
      %s30 = sadd.s32 1, %s21
      %s31 = scalar_select %p28, %s30, %s21
      %p32 = scmp.ge.s32.totalorder %s31, 2
      %s33 = scalar_select %p32, 0, %s31
      %s34 = ssub.s32 %s21, %s33
      %s35 = ssub.s32 %s22, %s29
      %s36 = sor.u32 %s34, %s35
      %p37 = scmp.eq.s32.totalorder %s36, 0
      %s39 = sadd.s32 %s38, 1
      %s40 = scalar_select %p37, %s38, %s39
      %p43 = pneg %p37
      %p44 = scmp.eq.s32.totalorder %s14, 3
      %p45 = por %p43, %p44
      %p46 = scmp.ne.s32.totalorder %s38, %s41
      %p47 = scmp.eq.s32.totalorder %s14, 0
      %p48 = por %p46, %p47
      %p49 = scmp.ne.s32.totalorder %s38, %s41
      %p50 = scmp.eq.s32.totalorder %s19, 3
      %p51 = por %p49, %p50
      %p52 = scmp.ne.s32.totalorder %s41, %s42
      %p53 = scmp.eq.s32.totalorder %s19, 0
      %p54 = por %p52, %p53
      %p55 = scmp.ne.s32.totalorder %s41, %s42
      %p56 = scmp.eq.s32.totalorder %s20, 3
      %p57 = por %p55, %p56
      %p59 = scmp.ne.s32.totalorder %s42, %s58
      %p60 = scmp.eq.s32.totalorder %s20, 0
      %p61 = por %p59, %p60
      %s63 = sadd.s32 %s62, 1
      %p66 = scmp.eq.s32.totalorder %s14, 3
      %p67 = scmp.ne.s32.totalorder %s62, %s64
      %p68 = scmp.eq.s32.totalorder %s14, 0
      %p69 = por %p67, %p68
      %p70 = scmp.ne.s32.totalorder %s62, %s64
      %p71 = scmp.eq.s32.totalorder %s19, 3
      %p72 = por %p70, %p71
      %p73 = scmp.ne.s32.totalorder %s64, %s65
      %p74 = scmp.eq.s32.totalorder %s19, 0
      %p75 = por %p73, %p74
      %p76 = scmp.ne.s32.totalorder %s64, %s65
      %p77 = scmp.eq.s32.totalorder %s20, 3
      %p78 = por %p76, %p77
      %p80 = scmp.ne.s32.totalorder %s65, %s79
      %p81 = scmp.eq.s32.totalorder %s20, 0
      %p82 = por %p80, %p81
      %s84 = sadd.s32 %s83, 1
      %p87 = scmp.eq.s32.totalorder %s14, 3
      %p88 = scmp.ne.s32.totalorder %s83, %s85
      %p89 = scmp.eq.s32.totalorder %s14, 0
      %p90 = por %p88, %p89
      %p91 = scmp.ne.s32.totalorder %s83, %s85
      %p92 = scmp.eq.s32.totalorder %s19, 3
      %p93 = por %p91, %p92
      %p94 = scmp.ne.s32.totalorder %s85, %s86
      %p95 = scmp.eq.s32.totalorder %s19, 0
      %p96 = por %p94, %p95
      %p97 = scmp.ne.s32.totalorder %s85, %s86
      %p98 = scmp.eq.s32.totalorder %s20, 3
      %p99 = por %p97, %p98
      %p101 = scmp.ne.s32.totalorder %s86, %s100
      %p102 = scmp.eq.s32.totalorder %s20, 0
      %p103 = por %p101, %p102
      %s105 = sadd.s32 %s104, 1
      %p108 = scmp.eq.s32.totalorder %s14, 3
      %p109 = scmp.ne.s32.totalorder %s104, %s106
      %p110 = scmp.eq.s32.totalorder %s14, 0
      %p111 = por %p109, %p110
      %p112 = scmp.ne.s32.totalorder %s104, %s106
      %p113 = scmp.eq.s32.totalorder %s19, 3
      %p114 = por %p112, %p113
      %p115 = scmp.ne.s32.totalorder %s106, %s107
      %p116 = scmp.eq.s32.totalorder %s19, 0
      %p117 = por %p115, %p116
      %p118 = scmp.ne.s32.totalorder %s106, %s107
      %p119 = scmp.eq.s32.totalorder %s20, 3
      %p120 = por %p118, %p119
      %p122 = scmp.ne.s32.totalorder %s107, %s121
      %p123 = scmp.eq.s32.totalorder %s20, 0
      %p124 = por %p122, %p123
      %s126 = sadd.s32 %s125, 1
      %p129 = scmp.eq.s32.totalorder %s14, 3
      %p130 = scmp.ne.s32.totalorder %s125, %s127
      %p131 = scmp.eq.s32.totalorder %s14, 0
      %p132 = por %p130, %p131
      %p133 = scmp.ne.s32.totalorder %s125, %s127
      %p134 = scmp.eq.s32.totalorder %s19, 3
      %p135 = por %p133, %p134
      %p136 = scmp.ne.s32.totalorder %s127, %s128
      %p137 = scmp.eq.s32.totalorder %s19, 0
      %p138 = por %p136, %p137
      %p139 = scmp.ne.s32.totalorder %s127, %s128
      %p140 = scmp.eq.s32.totalorder %s20, 3
      %p141 = por %p139, %p140
      %p143 = scmp.ne.s32.totalorder %s128, %s142
      %p144 = scmp.eq.s32.totalorder %s20, 0
      %p145 = por %p143, %p144
      %s146 = ssub.s32 %s21, %s33
      %s147 = ssub.s32 %s22, %s29
      %s148 = sor.u32 %s146, %s147
      %p149 = scmp.eq.s32.totalorder %s148, 0
      %s151 = sadd.s32 %s150, 1
      %s152 = scalar_select %p149, %s150, %s151
      %p155 = pneg %p149
      %p156 = scmp.eq.s32.totalorder %s14, 3
      %p157 = por %p155, %p156
      %p158 = scmp.ne.s32.totalorder %s150, %s153
      %p159 = scmp.eq.s32.totalorder %s14, 0
      %p160 = por %p158, %p159
      %p161 = scmp.ne.s32.totalorder %s150, %s153
      %p162 = scmp.eq.s32.totalorder %s19, 3
      %p163 = por %p161, %p162
      %p164 = scmp.ne.s32.totalorder %s153, %s154
      %p165 = scmp.eq.s32.totalorder %s19, 0
      %p166 = por %p164, %p165
      %p167 = scmp.ne.s32.totalorder %s153, %s154
      %p168 = scmp.eq.s32.totalorder %s20, 3
      %p169 = por %p167, %p168
      %p171 = scmp.ne.s32.totalorder %s154, %s170
      %p172 = scmp.eq.s32.totalorder %s20, 0
      %p173 = por %p171, %p172
      %p174 = scmp.le.s32.totalorder 1, %s14
      %p175 = scmp.lt.s32.totalorder %s14, 5
      %p176 = pnand %p174, %p175
      %p177 = pneg %p176
      // Predicated region
      $region9: #{residual_conv_module.1} parent=5 // pred_check
        _
      $region10: #{residual_conv_module.1} parent=5 // pred_check_branch
        %179 = sbr.rel (%p176) target = $region12
      $region11: #{residual_conv_module.1} parent=5 // pred_region
        %s180 = ssub.s32 %s14, 1
        // Predicated region
        $region13: #{residual_conv_module.1} parent=11 // pred_check
          %p181 = pneg %p75
        $region14: #{residual_conv_module.1} parent=11 // pred_check_branch
          %183 = sbr.rel (%p181) target = $region16
        $region15: #{residual_conv_module.1} parent=11 // pred_region
          _
        $region16: #{residual_conv_module.1} parent=11 // pred_fallthru
          _
        // Predicated region
        $region17: #{residual_conv_module.1} parent=11 // pred_check
          %p184 = pneg %p96
        $region18: #{residual_conv_module.1} parent=11 // pred_check_branch
          %186 = sbr.rel (%p184) target = $region20
        $region19: #{residual_conv_module.1} parent=11 // pred_region
          _
        $region20: #{residual_conv_module.1} parent=11 // pred_fallthru
          _
        // Predicated region
        $region21: #{residual_conv_module.1} parent=11 // pred_check
          %p187 = pneg %p117
        $region22: #{residual_conv_module.1} parent=11 // pred_check_branch
          %189 = sbr.rel (%p187) target = $region24
        $region23: #{residual_conv_module.1} parent=11 // pred_region
          _
        $region24: #{residual_conv_module.1} parent=11 // pred_fallthru
          _
        // Predicated region
        $region25: #{residual_conv_module.1} parent=11 // pred_check
          %p190 = pneg %p138
        $region26: #{residual_conv_module.1} parent=11 // pred_check_branch
          %192 = sbr.rel (%p190) target = $region28
        $region27: #{residual_conv_module.1} parent=11 // pred_region
          _
        $region28: #{residual_conv_module.1} parent=11 // pred_fallthru
          _
      $region12: #{residual_conv_module.1} parent=5 // pred_fallthru
        _
      %p193 = scmp.lt.s32.totalorder %s14, 4
      // Predicated region
      $region29: #{residual_conv_module.1} parent=5 // pred_check
        %p194 = pneg %p193
      $region30: #{residual_conv_module.1} parent=5 // pred_check_branch
        %196 = sbr.rel (%p194) target = $region32
      $region31: #{residual_conv_module.1} parent=5 // pred_region
        // Predicated region
        $region33: #{residual_conv_module.1} parent=31 // pred_check
          %p197 = pneg %p48
        $region34: #{residual_conv_module.1} parent=31 // pred_check_branch
          %199 = sbr.rel (%p197) target = $region36
        $region35: #{residual_conv_module.1} parent=31 // pred_region
          %p200 = scmp.lt.s32.totalorder %s21, 1
          %s201 = scalar_select %p200, %s21, 1
          %p202 = scmp.lt.s32.totalorder %s22, 1
          %s203 = scalar_select %p202, %s22, 1
          %s204 = smul.addr %s203, 32
          %s205 = smul.addr %s201, 64
          %s206 = sadd.s32 %s204, %s205
          %s207 = smul.addr %s206, 4
          %s208 = scalar_lea.vmem %s0, %s207
        $region36: #{residual_conv_module.1} parent=31 // pred_fallthru
          _
      $region32: #{residual_conv_module.1} parent=5 // pred_fallthru
        _
      %p209 = scmp.le.s32.totalorder 1, %s14
      %p210 = scmp.lt.s32.totalorder %s14, 5
      %p211 = pnand %p209, %p210
      %p212 = pneg %p211
      // Predicated region
      $region37: #{residual_conv_module.1} parent=5 // pred_check
        _
      $region38: #{residual_conv_module.1} parent=5 // pred_check_branch
        %214 = sbr.rel (%p211) target = $region40
      $region39: #{residual_conv_module.1} parent=5 // pred_region
        %s215 = ssub.s32 %s14, 1
        %p216 = scmp.lt.s32.totalorder %s23, 1
        %s217 = scalar_select %p216, %s23, 1
        %p218 = scmp.lt.s32.totalorder %s24, 1
        %s219 = scalar_select %p218, %s24, 1
        %s220 = smul.addr %s219, 32
        %s221 = smul.addr %s217, 64
        %s222 = sadd.s32 %s220, %s221
        %s223 = smul.addr %s222, 4
        %s224 = scalar_lea.vmem %s0, %s223
        %p225 = pneg %p54
        %p226 = pneg %p51
        %p227 = pneg %p75
        %p228 = pneg %p72
        %p229 = pneg %p96
        %p230 = pneg %p93
        %p231 = pneg %p117
        %p232 = pneg %p114
        %p233 = pneg %p138
        %p234 = pneg %p135
        %p235 = pneg %p166
        %p236 = pneg %p163
        %s237 = sand.u32 %s153, 1
        %s238 = scalar_lea.sflag [#allocation3], %s237
        %s239 = sand.u32 %s153, 1
        %s240 = smul.addr %s239, 128
        %s241 = scalar_lea.vmem [#allocation2], %s240
        %p242 = scmp.lt.s32.totalorder %s23, 1
        %s243 = scalar_select %p242, %s23, 1
        %p244 = scmp.lt.s32.totalorder %s24, 1
        %s245 = scalar_select %p244, %s24, 1
        %s246 = smul.addr %s245, 32
        %s247 = smul.addr %s243, 64
        %s248 = sadd.s32 %s246, %s247
        %s249 = smul.addr %s248, 4
        %s250 = scalar_lea.vmem %s0, %s249
        %v252 = vld [vmem:[%s250] sm:$0xff]
        %v253 = vld [vmem:[%s250 + $0x8] sm:$0xff]
        %v254 = vld [vmem:[%s250 + $0x10] sm:$0xff]
        %v255 = vld [vmem:[%s250 + $0x18] sm:$0xff]
        %v256 = vld [vmem:[%s250 + $0x20] sm:$0xff]
        %v257 = vld [vmem:[%s250 + $0x28] sm:$0xff]
        %v258 = vld [vmem:[%s250 + $0x30] sm:$0xff]
        %v259 = vld [vmem:[%s250 + $0x38] sm:$0xff]
        %v260 = vld [vmem:[%s250 + $0x40] sm:$0xff]
        %v261 = vld [vmem:[%s250 + $0x48] sm:$0xff]
        %v262 = vld [vmem:[%s250 + $0x50] sm:$0xff]
        %v263 = vld [vmem:[%s250 + $0x58] sm:$0xff]
        %v264 = vld [vmem:[%s250 + $0x60] sm:$0xff]
        %v265 = vld [vmem:[%s250 + $0x68] sm:$0xff]
        %v266 = vld [vmem:[%s250 + $0x70] sm:$0xff]
        %v267 = vld [vmem:[%s250 + $0x78] sm:$0xff]
        %v284 = vunpack.c.l.b16 %v252
        %v285 = vunpack.c.l.b16 %v253
        %v286 = vunpack.c.l.b16 %v254
        %v287 = vunpack.c.l.b16 %v255
        %v288 = vunpack.c.l.b16 %v256
        %v289 = vunpack.c.l.b16 %v257
        %v290 = vunpack.c.l.b16 %v258
        %v291 = vunpack.c.l.b16 %v259
        %v292 = vunpack.c.l.b16 %v260
        %v293 = vunpack.c.l.b16 %v261
        %v294 = vunpack.c.l.b16 %v262
        %v295 = vunpack.c.l.b16 %v263
        %v296 = vunpack.c.l.b16 %v264
        %v297 = vunpack.c.l.b16 %v265
        %v298 = vunpack.c.l.b16 %v266
        %v299 = vunpack.c.l.b16 %v267
        %v300 = vpack.c.b16 %v285, %v284
        %v301 = vpack.c.b16 %v287, %v286
        %v302 = vpack.c.b16 %v289, %v288
        %v303 = vpack.c.b16 %v291, %v290
        %v304 = vpack.c.b16 %v293, %v292
        %v305 = vpack.c.b16 %v295, %v294
        %v306 = vpack.c.b16 %v297, %v296
        %v307 = vpack.c.b16 %v299, %v298
        %v316 = vunpack.c.h.b16 %v252
        %v317 = vunpack.c.h.b16 %v253
        %v318 = vunpack.c.h.b16 %v254
        %v319 = vunpack.c.h.b16 %v255
        %v320 = vunpack.c.h.b16 %v256
        %v321 = vunpack.c.h.b16 %v257
        %v322 = vunpack.c.h.b16 %v258
        %v323 = vunpack.c.h.b16 %v259
        %v324 = vunpack.c.h.b16 %v260
        %v325 = vunpack.c.h.b16 %v261
        %v326 = vunpack.c.h.b16 %v262
        %v327 = vunpack.c.h.b16 %v263
        %v328 = vunpack.c.h.b16 %v264
        %v329 = vunpack.c.h.b16 %v265
        %v330 = vunpack.c.h.b16 %v266
        %v331 = vunpack.c.h.b16 %v267
        %v332 = vpack.c.b16 %v317, %v316
        %v333 = vpack.c.b16 %v319, %v318
        %v334 = vpack.c.b16 %v321, %v320
        %v335 = vpack.c.b16 %v323, %v322
        %v336 = vpack.c.b16 %v325, %v324
        %v337 = vpack.c.b16 %v327, %v326
        %v338 = vpack.c.b16 %v329, %v328
        %v339 = vpack.c.b16 %v331, %v330
        %340 = vrot.lane.b32.xlu0 %v300, 127
        %v341 = vpop.permute.xlu0 %340
        %342 = vrot.lane.b32.xlu0 %v332, 127
        %v343 = vpop.permute.xlu0 %342
        %344 = vrot.lane.b32.xlu0 %v301, 127
        %v345 = vpop.permute.xlu0 %344
        %346 = vrot.lane.b32.xlu0 %v333, 127
        %v347 = vpop.permute.xlu0 %346
        %348 = vrot.lane.b32.xlu0 %v302, 127
        %v349 = vpop.permute.xlu0 %348
        %350 = vrot.lane.b32.xlu0 %v334, 127
        %v351 = vpop.permute.xlu0 %350
        %352 = vrot.lane.b32.xlu0 %v303, 127
        %v353 = vpop.permute.xlu0 %352
        %354 = vrot.lane.b32.xlu0 %v335, 127
        %v355 = vpop.permute.xlu0 %354
        %356 = vrot.lane.b32.xlu0 %v304, 127
        %v357 = vpop.permute.xlu0 %356
        %358 = vrot.lane.b32.xlu0 %v336, 127
        %v359 = vpop.permute.xlu0 %358
        %360 = vrot.lane.b32.xlu0 %v305, 127
        %v361 = vpop.permute.xlu0 %360
        %362 = vrot.lane.b32.xlu0 %v337, 127
        %v363 = vpop.permute.xlu0 %362
        %364 = vrot.lane.b32.xlu0 %v306, 127
        %v365 = vpop.permute.xlu0 %364
        %366 = vrot.lane.b32.xlu0 %v338, 127
        %v367 = vpop.permute.xlu0 %366
        %368 = vrot.lane.b32.xlu0 %v307, 127
        %v369 = vpop.permute.xlu0 %368
        %370 = vrot.lane.b32.xlu0 %v339, 127
        %v371 = vpop.permute.xlu0 %370
        %vm372 = vcmask 1039360
        %v373 = vsel %vm372, %v341, %v343
        %v374 = vsel %vm372, %v345, %v347
        %v375 = vsel %vm372, %v349, %v351
        %v376 = vsel %vm372, %v353, %v355
        %v377 = vsel %vm372, %v357, %v359
        %v378 = vsel %vm372, %v361, %v363
        %v379 = vsel %vm372, %v365, %v367
        %v380 = vsel %vm372, %v369, %v371
        %389 = vrot.lane.b32.xlu0 %v300, 126
        %v390 = vpop.permute.xlu0 %389
        %391 = vrot.lane.b32.xlu0 %v332, 126
        %v392 = vpop.permute.xlu0 %391
        %393 = vrot.lane.b32.xlu0 %v301, 126
        %v394 = vpop.permute.xlu0 %393
        %395 = vrot.lane.b32.xlu0 %v333, 126
        %v396 = vpop.permute.xlu0 %395
        %397 = vrot.lane.b32.xlu0 %v302, 126
        %v398 = vpop.permute.xlu0 %397
        %399 = vrot.lane.b32.xlu0 %v334, 126
        %v400 = vpop.permute.xlu0 %399
        %401 = vrot.lane.b32.xlu0 %v303, 126
        %v402 = vpop.permute.xlu0 %401
        %403 = vrot.lane.b32.xlu0 %v335, 126
        %v404 = vpop.permute.xlu0 %403
        %405 = vrot.lane.b32.xlu0 %v304, 126
        %v406 = vpop.permute.xlu0 %405
        %407 = vrot.lane.b32.xlu0 %v336, 126
        %v408 = vpop.permute.xlu0 %407
        %409 = vrot.lane.b32.xlu0 %v305, 126
        %v410 = vpop.permute.xlu0 %409
        %411 = vrot.lane.b32.xlu0 %v337, 126
        %v412 = vpop.permute.xlu0 %411
        %413 = vrot.lane.b32.xlu0 %v306, 126
        %v414 = vpop.permute.xlu0 %413
        %415 = vrot.lane.b32.xlu0 %v338, 126
        %v416 = vpop.permute.xlu0 %415
        %417 = vrot.lane.b32.xlu0 %v307, 126
        %v418 = vpop.permute.xlu0 %417
        %419 = vrot.lane.b32.xlu0 %v339, 126
        %v420 = vpop.permute.xlu0 %419
        %vm421 = vcmask 1031168
        %v422 = vsel %vm421, %v390, %v392
        %v423 = vsel %vm421, %v394, %v396
        %v424 = vsel %vm421, %v398, %v400
        %v425 = vsel %vm421, %v402, %v404
        %v426 = vsel %vm421, %v406, %v408
        %v427 = vsel %vm421, %v410, %v412
        %v428 = vsel %vm421, %v414, %v416
        %v429 = vsel %vm421, %v418, %v420
        %v438 = vld [vmem:[%s1] sm:$0xff]
        %v439 = vld [vmem:[%s1 + $0x8] sm:$0xf]
        %v440 = vld [vmem:[%s1 + $0xc] sm:$0xff]
        %v441 = vld [vmem:[%s1 + $0x14] sm:$0xf]
        %v442 = vld [vmem:[%s1 + $0x18] sm:$0xff]
        %v443 = vld [vmem:[%s1 + $0x20] sm:$0xf]
        %v444 = vld [vmem:[%s1 + $0x24] sm:$0xff]
        %v445 = vld [vmem:[%s1 + $0x2c] sm:$0xf]
        %v446 = vld [vmem:[%s1 + $0x30] sm:$0xff]
        %v447 = vld [vmem:[%s1 + $0x38] sm:$0xf]
        %v448 = vld [vmem:[%s1 + $0x3c] sm:$0xff]
        %v449 = vld [vmem:[%s1 + $0x44] sm:$0xf]
        %v450 = vld [vmem:[%s1 + $0x48] sm:$0xff]
        %v451 = vld [vmem:[%s1 + $0x50] sm:$0xf]
        %v452 = vld [vmem:[%s1 + $0x54] sm:$0xff]
        %v453 = vld [vmem:[%s1 + $0x5c] sm:$0xf]
        %v454 = vld [vmem:[%s1 + $0x60] sm:$0xff]
        %v455 = vld [vmem:[%s1 + $0x68] sm:$0xf]
        %v456 = vld [vmem:[%s1 + $0x6c] sm:$0xff]
        %v457 = vld [vmem:[%s1 + $0x74] sm:$0xf]
        %v458 = vld [vmem:[%s1 + $0x78] sm:$0xff]
        %v459 = vld [vmem:[%s1 + $0x80] sm:$0xf]
        %v460 = vld [vmem:[%s1 + $0x84] sm:$0xff]
        %v461 = vld [vmem:[%s1 + $0x8c] sm:$0xf]
        %v462 = vld [vmem:[%s1 + $0x90] sm:$0xff]
        %v463 = vld [vmem:[%s1 + $0x98] sm:$0xf]
        %v464 = vld [vmem:[%s1 + $0x9c] sm:$0xff]
        %v465 = vld [vmem:[%s1 + $0xa4] sm:$0xf]
        %v466 = vld [vmem:[%s1 + $0xa8] sm:$0xff]
        %v467 = vld [vmem:[%s1 + $0xb0] sm:$0xf]
        %v468 = vld [vmem:[%s1 + $0xb4] sm:$0xff]
        %v469 = vld [vmem:[%s1 + $0xbc] sm:$0xf]
        %v470 = vld [vmem:[%s2] sm:$0xff]
        %v471 = vld [vmem:[%s2 + $0x8] sm:$0xff]
        %v472 = vld [vmem:[%s2 + $0x10] sm:$0xff]
        %v473 = vld [vmem:[%s2 + $0x18] sm:$0xff]
        %v474 = vld [vmem:[%s2 + $0x20] sm:$0xff]
        %v475 = vld [vmem:[%s2 + $0x28] sm:$0xff]
        %v476 = vld [vmem:[%s2 + $0x30] sm:$0xff]
        %v477 = vld [vmem:[%s2 + $0x38] sm:$0xff]
        %v478 = vld [vmem:[%s2 + $0x40] sm:$0xff]
        %v479 = vld [vmem:[%s2 + $0x48] sm:$0xff]
        %v480 = vld [vmem:[%s2 + $0x50] sm:$0xff]
        %v481 = vld [vmem:[%s2 + $0x58] sm:$0xff]
        %v482 = vld [vmem:[%s2 + $0x60] sm:$0xff]
        %v483 = vld [vmem:[%s2 + $0x68] sm:$0xff]
        %v484 = vld [vmem:[%s2 + $0x70] sm:$0xff]
        %v485 = vld [vmem:[%s2 + $0x78] sm:$0xff]
        %487 = vset.pattern.permute.xlu0 0
        %488 = vperm.xlu0 %487, %v470
        %v489 = vpop.permute.xlu0 %488
        %492 = vset.pattern.permute.xlu0 0
        %493 = vperm.xlu0 %492, %v471
        %v494 = vpop.permute.xlu0 %493
        %497 = vset.pattern.permute.xlu0 0
        %498 = vperm.xlu0 %497, %v472
        %v499 = vpop.permute.xlu0 %498
        %502 = vset.pattern.permute.xlu0 0
        %503 = vperm.xlu0 %502, %v473
        %v504 = vpop.permute.xlu0 %503
        %507 = vset.pattern.permute.xlu0 0
        %508 = vperm.xlu0 %507, %v474
        %v509 = vpop.permute.xlu0 %508
        %512 = vset.pattern.permute.xlu0 0
        %513 = vperm.xlu0 %512, %v475
        %v514 = vpop.permute.xlu0 %513
        %517 = vset.pattern.permute.xlu0 0
        %518 = vperm.xlu0 %517, %v476
        %v519 = vpop.permute.xlu0 %518
        %522 = vset.pattern.permute.xlu0 0
        %523 = vperm.xlu0 %522, %v477
        %v524 = vpop.permute.xlu0 %523
        %527 = vset.pattern.permute.xlu0 0
        %528 = vperm.xlu0 %527, %v478
        %v529 = vpop.permute.xlu0 %528
        %532 = vset.pattern.permute.xlu0 0
        %533 = vperm.xlu0 %532, %v479
        %v534 = vpop.permute.xlu0 %533
        %537 = vset.pattern.permute.xlu0 0
        %538 = vperm.xlu0 %537, %v480
        %v539 = vpop.permute.xlu0 %538
        %542 = vset.pattern.permute.xlu0 0
        %543 = vperm.xlu0 %542, %v481
        %v544 = vpop.permute.xlu0 %543
        %547 = vset.pattern.permute.xlu0 0
        %548 = vperm.xlu0 %547, %v482
        %v549 = vpop.permute.xlu0 %548
        %552 = vset.pattern.permute.xlu0 0
        %553 = vperm.xlu0 %552, %v483
        %v554 = vpop.permute.xlu0 %553
        %557 = vset.pattern.permute.xlu0 0
        %558 = vperm.xlu0 %557, %v484
        %v559 = vpop.permute.xlu0 %558
        %562 = vset.pattern.permute.xlu0 0
        %563 = vperm.xlu0 %562, %v485
        %v564 = vpop.permute.xlu0 %563
        %v598 = vunpack.c.l.b16 %v438
        %v599 = vunpack.c.h.b16 %v438
        %v600 = vunpack.c.l.b16 %v439
        %v601 = vunpack.c.l.b16 %v440
        %v602 = vunpack.c.h.b16 %v440
        %v603 = vunpack.c.l.b16 %v441
        %v604 = vunpack.c.l.b16 %v442
        %v605 = vunpack.c.h.b16 %v442
        %v606 = vunpack.c.l.b16 %v443
        %v607 = vunpack.c.l.b16 %v444
        %v608 = vunpack.c.h.b16 %v444
        %v609 = vunpack.c.l.b16 %v445
        %v610 = vunpack.c.l.b16 %v446
        %v611 = vunpack.c.h.b16 %v446
        %v612 = vunpack.c.l.b16 %v447
        %v613 = vunpack.c.l.b16 %v448
        %v614 = vunpack.c.h.b16 %v448
        %v615 = vunpack.c.l.b16 %v449
        %v616 = vunpack.c.l.b16 %v450
        %v617 = vunpack.c.h.b16 %v450
        %v618 = vunpack.c.l.b16 %v451
        %v619 = vunpack.c.l.b16 %v452
        %v620 = vunpack.c.h.b16 %v452
        %v621 = vunpack.c.l.b16 %v453
        %v622 = vunpack.c.l.b16 %v454
        %v623 = vunpack.c.h.b16 %v454
        %v624 = vunpack.c.l.b16 %v455
        %v625 = vunpack.c.l.b16 %v456
        %v626 = vunpack.c.h.b16 %v456
        %v627 = vunpack.c.l.b16 %v457
        %v628 = vunpack.c.l.b16 %v458
        %v629 = vunpack.c.h.b16 %v458
        %v630 = vunpack.c.l.b16 %v459
        %v631 = vunpack.c.l.b16 %v460
        %v632 = vunpack.c.h.b16 %v460
        %v633 = vunpack.c.l.b16 %v461
        %v634 = vunpack.c.l.b16 %v462
        %v635 = vunpack.c.h.b16 %v462
        %v636 = vunpack.c.l.b16 %v463
        %v637 = vunpack.c.l.b16 %v464
        %v638 = vunpack.c.h.b16 %v464
        %v639 = vunpack.c.l.b16 %v465
        %v640 = vunpack.c.l.b16 %v466
        %v641 = vunpack.c.h.b16 %v466
        %v642 = vunpack.c.l.b16 %v467
        %v643 = vunpack.c.l.b16 %v468
        %v644 = vunpack.c.h.b16 %v468
        %v645 = vunpack.c.l.b16 %v469
        %v646 = vpack.c.b16 %v601, %v598
        %v647 = vpack.c.b16 %v602, %v599
        %v648 = vpack.c.b16 %v603, %v600
        %v649 = vpack.c.b16 %v607, %v604
        %v650 = vpack.c.b16 %v608, %v605
        %v651 = vpack.c.b16 %v609, %v606
        %v652 = vpack.c.b16 %v613, %v610
        %v653 = vpack.c.b16 %v614, %v611
        %v654 = vpack.c.b16 %v615, %v612
        %v655 = vpack.c.b16 %v619, %v616
        %v656 = vpack.c.b16 %v620, %v617
        %v657 = vpack.c.b16 %v621, %v618
        %v658 = vpack.c.b16 %v625, %v622
        %v659 = vpack.c.b16 %v626, %v623
        %v660 = vpack.c.b16 %v627, %v624
        %v661 = vpack.c.b16 %v631, %v628
        %v662 = vpack.c.b16 %v632, %v629
        %v663 = vpack.c.b16 %v633, %v630
        %v664 = vpack.c.b16 %v637, %v634
        %v665 = vpack.c.b16 %v638, %v635
        %v666 = vpack.c.b16 %v639, %v636
        %v667 = vpack.c.b16 %v643, %v640
        %v668 = vpack.c.b16 %v644, %v641
        %v669 = vpack.c.b16 %v645, %v642
        %694 = vmatprep.subr.bf16.mxu0 0
        %695 = vmatpush1.bf16.msra.mxu0 %v307
        %696 = vmatprep.subr.bf16.mxu0 0
        %697 = vmatpush1.bf16.msra.mxu0 %v306
        %698 = vmatprep.subr.bf16.mxu0 0
        %699 = vmatpush1.bf16.msra.mxu0 %v305
        %700 = vmatprep.subr.bf16.mxu0 0
        %701 = vmatpush1.bf16.msra.mxu0 %v304
        %702 = vmatprep.subr.bf16.mxu0 0
        %703 = vmatpush1.bf16.msra.mxu0 %v303
        %704 = vmatprep.subr.bf16.mxu0 0
        %705 = vmatpush1.bf16.msra.mxu0 %v302
        %706 = vmatprep.subr.bf16.mxu0 0
        %707 = vmatpush1.bf16.msra.mxu0 %v301
        %708 = vmatprep.subr.bf16.mxu0 0
        %709 = vmatpush1.bf16.msra.mxu0 %v300
        %710 = vmatprep.subr.bf16.mxu0 0
        %711 = vmatpush2.bf16.msra.mxu0 %v380
        %712 = vmatprep.subr.bf16.mxu0 0
        %713 = vmatpush2.bf16.msra.mxu0 %v379
        %714 = vmatprep.subr.bf16.mxu0 0
        %715 = vmatpush2.bf16.msra.mxu0 %v378
        %716 = vmatprep.subr.bf16.mxu0 0
        %717 = vmatpush2.bf16.msra.mxu0 %v377
        %718 = vmatprep.subr.bf16.mxu0 0
        %719 = vmatpush2.bf16.msra.mxu0 %v376
        %720 = vmatprep.subr.bf16.mxu0 0
        %721 = vmatpush2.bf16.msra.mxu0 %v375
        %722 = vmatprep.subr.bf16.mxu0 0
        %723 = vmatpush2.bf16.msra.mxu0 %v374
        %724 = vmatprep.subr.bf16.mxu0 0
        %725 = vmatpush2.bf16.msra.mxu0 %v373
        %726 = vmatprep.mubr.bf16.mxu0 %v647
        %727 = vmatmul.mubr.bf16.gmra.mxu0 %v646
        %v728 = vpop.f32.mrf.mxu0
        %v729 = vadd.f32 %v489, %v728
        %v730 = vpop.f32.mrf.mxu0
        %v731 = vpop.f32.mrf.mxu0
        %v732 = vadd.f32 %v494, %v731
        %v733 = vpop.f32.mrf.mxu0
        %734 = vmatprep.mubr.bf16.mxu0 %v650
        %735 = vmatmul.mubr.bf16.gmra.mxu0 %v649
        %v736 = vpop.f32.mrf.mxu0
        %v737 = vadd.f32 %v499, %v736
        %v738 = vpop.f32.mrf.mxu0
        %v739 = vpop.f32.mrf.mxu0
        %v740 = vadd.f32 %v504, %v739
        %v741 = vpop.f32.mrf.mxu0
        %742 = vmatprep.mubr.bf16.mxu0 %v653
        %743 = vmatmul.mubr.bf16.gmra.mxu0 %v652
        %v744 = vpop.f32.mrf.mxu0
        %v745 = vadd.f32 %v509, %v744
        %v746 = vpop.f32.mrf.mxu0
        %v747 = vpop.f32.mrf.mxu0
        %v748 = vadd.f32 %v514, %v747
        %v749 = vpop.f32.mrf.mxu0
        %750 = vmatprep.mubr.bf16.mxu0 %v656
        %751 = vmatmul.mubr.bf16.gmra.mxu0 %v655
        %v752 = vpop.f32.mrf.mxu0
        %v753 = vadd.f32 %v519, %v752
        %v754 = vpop.f32.mrf.mxu0
        %v755 = vpop.f32.mrf.mxu0
        %v756 = vadd.f32 %v524, %v755
        %v757 = vpop.f32.mrf.mxu0
        %758 = vmatprep.mubr.bf16.mxu0 %v659
        %759 = vmatmul.mubr.bf16.gmra.mxu0 %v658
        %v760 = vpop.f32.mrf.mxu0
        %v761 = vadd.f32 %v529, %v760
        %v762 = vpop.f32.mrf.mxu0
        %v763 = vpop.f32.mrf.mxu0
        %v764 = vadd.f32 %v534, %v763
        %v765 = vpop.f32.mrf.mxu0
        %766 = vmatprep.mubr.bf16.mxu0 %v662
        %767 = vmatmul.mubr.bf16.gmra.mxu0 %v661
        %v768 = vpop.f32.mrf.mxu0
        %v769 = vadd.f32 %v539, %v768
        %v770 = vpop.f32.mrf.mxu0
        %v771 = vpop.f32.mrf.mxu0
        %v772 = vadd.f32 %v544, %v771
        %v773 = vpop.f32.mrf.mxu0
        %774 = vmatprep.mubr.bf16.mxu0 %v665
        %775 = vmatmul.mubr.bf16.gmra.mxu0 %v664
        %v776 = vpop.f32.mrf.mxu0
        %v777 = vadd.f32 %v549, %v776
        %v778 = vpop.f32.mrf.mxu0
        %v779 = vpop.f32.mrf.mxu0
        %v780 = vadd.f32 %v554, %v779
        %v781 = vpop.f32.mrf.mxu0
        %782 = vmatprep.mubr.bf16.mxu0 %v668
        %783 = vmatmul.mubr.bf16.gmra.mxu0 %v667
        %v784 = vpop.f32.mrf.mxu0
        %v785 = vadd.f32 %v559, %v784
        %v786 = vpop.f32.mrf.mxu0
        %v787 = vpop.f32.mrf.mxu0
        %v788 = vadd.f32 %v564, %v787
        %v789 = vpop.f32.mrf.mxu0
        %790 = vdwg.mxu0
        %791 = vmatprep.subr.bf16.mxu0 0
        %792 = vmatpush1.bf16.msra.mxu0 %v429
        %793 = vmatprep.subr.bf16.mxu0 0
        %794 = vmatpush1.bf16.msra.mxu0 %v428
        %795 = vmatprep.subr.bf16.mxu0 0
        %796 = vmatpush1.bf16.msra.mxu0 %v427
        %797 = vmatprep.subr.bf16.mxu0 0
        %798 = vmatpush1.bf16.msra.mxu0 %v426
        %799 = vmatprep.subr.bf16.mxu0 0
        %800 = vmatpush1.bf16.msra.mxu0 %v425
        %801 = vmatprep.subr.bf16.mxu0 0
        %802 = vmatpush1.bf16.msra.mxu0 %v424
        %803 = vmatprep.subr.bf16.mxu0 0
        %804 = vmatpush1.bf16.msra.mxu0 %v423
        %805 = vmatprep.subr.bf16.mxu0 0
        %806 = vmatpush1.bf16.msra.mxu0 %v422
        %807 = vmatprep.subr.bf16.mxu0 0
        %808 = vmatpush2.bf16.msra.mxu0 0
        %809 = vmatprep.subr.bf16.mxu0 0
        %810 = vmatpush2.bf16.msra.mxu0 0
        %811 = vmatprep.subr.bf16.mxu0 0
        %812 = vmatpush2.bf16.msra.mxu0 0
        %813 = vmatprep.subr.bf16.mxu0 0
        %814 = vmatpush2.bf16.msra.mxu0 0
        %815 = vmatprep.subr.bf16.mxu0 0
        %816 = vmatpush2.bf16.msra.mxu0 0
        %817 = vmatprep.subr.bf16.mxu0 0
        %818 = vmatpush2.bf16.msra.mxu0 0
        %819 = vmatprep.subr.bf16.mxu0 0
        %820 = vmatpush2.bf16.msra.mxu0 0
        %821 = vmatprep.subr.bf16.mxu0 0
        %822 = vmatpush2.bf16.msra.mxu0 0
        %823 = vmatprep.mubr.bf16.mxu0 0
        %824 = vmatmul.mubr.bf16.gmra.mxu0 %v648
        %v825 = vpop.f32.mrf.mxu0
        %v826 = vadd.f32 %v729, %v825
        %v827 = vpop.f32.mrf.mxu0
        %v828 = vpop.f32.mrf.mxu0
        %v829 = vadd.f32 %v732, %v828
        %v830 = vpop.f32.mrf.mxu0
        %831 = vmatprep.mubr.bf16.mxu0 0
        %832 = vmatmul.mubr.bf16.gmra.mxu0 %v651
        %v833 = vpop.f32.mrf.mxu0
        %v834 = vadd.f32 %v737, %v833
        %v835 = vpop.f32.mrf.mxu0
        %v836 = vpop.f32.mrf.mxu0
        %v837 = vadd.f32 %v740, %v836
        %v838 = vpop.f32.mrf.mxu0
        %839 = vmatprep.mubr.bf16.mxu0 0
        %840 = vmatmul.mubr.bf16.gmra.mxu0 %v654
        %v841 = vpop.f32.mrf.mxu0
        %v842 = vadd.f32 %v745, %v841
        %v843 = vpop.f32.mrf.mxu0
        %v844 = vpop.f32.mrf.mxu0
        %v845 = vadd.f32 %v748, %v844
        %v846 = vpop.f32.mrf.mxu0
        %847 = vmatprep.mubr.bf16.mxu0 0
        %848 = vmatmul.mubr.bf16.gmra.mxu0 %v657
        %v849 = vpop.f32.mrf.mxu0
        %v850 = vadd.f32 %v753, %v849
        %v851 = vpop.f32.mrf.mxu0
        %v852 = vpop.f32.mrf.mxu0
        %v853 = vadd.f32 %v756, %v852
        %v854 = vpop.f32.mrf.mxu0
        %855 = vmatprep.mubr.bf16.mxu0 0
        %856 = vmatmul.mubr.bf16.gmra.mxu0 %v660
        %v857 = vpop.f32.mrf.mxu0
        %v858 = vadd.f32 %v761, %v857
        %v859 = vpop.f32.mrf.mxu0
        %v860 = vpop.f32.mrf.mxu0
        %v861 = vadd.f32 %v764, %v860
        %v862 = vpop.f32.mrf.mxu0
        %863 = vmatprep.mubr.bf16.mxu0 0
        %864 = vmatmul.mubr.bf16.gmra.mxu0 %v663
        %v865 = vpop.f32.mrf.mxu0
        %v866 = vadd.f32 %v769, %v865
        %v867 = vpop.f32.mrf.mxu0
        %v868 = vpop.f32.mrf.mxu0
        %v869 = vadd.f32 %v772, %v868
        %v870 = vpop.f32.mrf.mxu0
        %871 = vmatprep.mubr.bf16.mxu0 0
        %872 = vmatmul.mubr.bf16.gmra.mxu0 %v666
        %v873 = vpop.f32.mrf.mxu0
        %v874 = vadd.f32 %v777, %v873
        %v875 = vpop.f32.mrf.mxu0
        %v876 = vpop.f32.mrf.mxu0
        %v877 = vadd.f32 %v780, %v876
        %v878 = vpop.f32.mrf.mxu0
        %879 = vmatprep.mubr.bf16.mxu0 0
        %880 = vmatmul.mubr.bf16.gmra.mxu0 %v669
        %v881 = vpop.f32.mrf.mxu0
        %v882 = vadd.f32 %v785, %v881
        %v883 = vpop.f32.mrf.mxu0
        %v884 = vpop.f32.mrf.mxu0
        %v885 = vadd.f32 %v788, %v884
        %v886 = vpop.f32.mrf.mxu0
        %887 = vdwg.mxu0
        %v888 = vmax.f32 %v826, 0.0
        %v889 = vmax.f32 %v829, 0.0
        %v890 = vmax.f32 %v834, 0.0
        %v891 = vmax.f32 %v837, 0.0
        %v892 = vmax.f32 %v842, 0.0
        %v893 = vmax.f32 %v845, 0.0
        %v894 = vmax.f32 %v850, 0.0
        %v895 = vmax.f32 %v853, 0.0
        %v896 = vmax.f32 %v858, 0.0
        %v897 = vmax.f32 %v861, 0.0
        %v898 = vmax.f32 %v866, 0.0
        %v899 = vmax.f32 %v869, 0.0
        %v900 = vmax.f32 %v874, 0.0
        %v901 = vmax.f32 %v877, 0.0
        %v902 = vmax.f32 %v882, 0.0
        %v903 = vmax.f32 %v885, 0.0
        %v904 = vld [vmem:[%s3] sm:$0xf]
        %v905 = vld [vmem:[%s3 + $0x4] sm:$0xf]
        %v906 = vld [vmem:[%s3 + $0x8] sm:$0xf]
        %v907 = vld [vmem:[%s3 + $0xc] sm:$0xf]
        %v908 = vld [vmem:[%s3 + $0x10] sm:$0xf]
        %v909 = vld [vmem:[%s3 + $0x14] sm:$0xf]
        %v910 = vld [vmem:[%s3 + $0x18] sm:$0xf]
        %v911 = vld [vmem:[%s3 + $0x1c] sm:$0xf]
        %v912 = vld [vmem:[%s3 + $0x20] sm:$0xf]
        %v913 = vld [vmem:[%s3 + $0x24] sm:$0xf]
        %v914 = vld [vmem:[%s3 + $0x28] sm:$0xf]
        %v915 = vld [vmem:[%s3 + $0x2c] sm:$0xf]
        %v916 = vld [vmem:[%s3 + $0x30] sm:$0xf]
        %v917 = vld [vmem:[%s3 + $0x34] sm:$0xf]
        %v918 = vld [vmem:[%s3 + $0x38] sm:$0xf]
        %v919 = vld [vmem:[%s3 + $0x3c] sm:$0xf]
        %v920 = vpack.c.bf16 %v889, %v888
        %v921 = vpack.c.bf16 %v891, %v890
        %v922 = vpack.c.bf16 %v893, %v892
        %v923 = vpack.c.bf16 %v895, %v894
        %v924 = vpack.c.bf16 %v897, %v896
        %v925 = vpack.c.bf16 %v899, %v898
        %v926 = vpack.c.bf16 %v901, %v900
        %v927 = vpack.c.bf16 %v903, %v902
        %v928 = vld [vmem:[%s4] sm:$0xff]
        %v929 = vld [vmem:[%s4 + $0x8] sm:$0xff]
        %v930 = vld [vmem:[%s4 + $0x10] sm:$0xff]
        %v931 = vld [vmem:[%s4 + $0x18] sm:$0xff]
        %v932 = vld [vmem:[%s4 + $0x20] sm:$0xff]
        %v933 = vld [vmem:[%s4 + $0x28] sm:$0xff]
        %v934 = vld [vmem:[%s4 + $0x30] sm:$0xff]
        %v935 = vld [vmem:[%s4 + $0x38] sm:$0xff]
        %v936 = vld [vmem:[%s4 + $0x40] sm:$0xff]
        %v937 = vld [vmem:[%s4 + $0x48] sm:$0xff]
        %v938 = vld [vmem:[%s4 + $0x50] sm:$0xff]
        %v939 = vld [vmem:[%s4 + $0x58] sm:$0xff]
        %v940 = vld [vmem:[%s4 + $0x60] sm:$0xff]
        %v941 = vld [vmem:[%s4 + $0x68] sm:$0xff]
        %v942 = vld [vmem:[%s4 + $0x70] sm:$0xff]
        %v943 = vld [vmem:[%s4 + $0x78] sm:$0xff]
        %945 = vset.pattern.permute.xlu0 0
        %946 = vperm.xlu0 %945, %v928
        %v947 = vpop.permute.xlu0 %946
        %950 = vset.pattern.permute.xlu0 0
        %951 = vperm.xlu0 %950, %v929
        %v952 = vpop.permute.xlu0 %951
        %955 = vset.pattern.permute.xlu0 0
        %956 = vperm.xlu0 %955, %v930
        %v957 = vpop.permute.xlu0 %956
        %960 = vset.pattern.permute.xlu0 0
        %961 = vperm.xlu0 %960, %v931
        %v962 = vpop.permute.xlu0 %961
        %965 = vset.pattern.permute.xlu0 0
        %966 = vperm.xlu0 %965, %v932
        %v967 = vpop.permute.xlu0 %966
        %970 = vset.pattern.permute.xlu0 0
        %971 = vperm.xlu0 %970, %v933
        %v972 = vpop.permute.xlu0 %971
        %975 = vset.pattern.permute.xlu0 0
        %976 = vperm.xlu0 %975, %v934
        %v977 = vpop.permute.xlu0 %976
        %980 = vset.pattern.permute.xlu0 0
        %981 = vperm.xlu0 %980, %v935
        %v982 = vpop.permute.xlu0 %981
        %985 = vset.pattern.permute.xlu0 0
        %986 = vperm.xlu0 %985, %v936
        %v987 = vpop.permute.xlu0 %986
        %990 = vset.pattern.permute.xlu0 0
        %991 = vperm.xlu0 %990, %v937
        %v992 = vpop.permute.xlu0 %991
        %995 = vset.pattern.permute.xlu0 0
        %996 = vperm.xlu0 %995, %v938
        %v997 = vpop.permute.xlu0 %996
        %1000 = vset.pattern.permute.xlu0 0
        %1001 = vperm.xlu0 %1000, %v939
        %v1002 = vpop.permute.xlu0 %1001
        %1005 = vset.pattern.permute.xlu0 0
        %1006 = vperm.xlu0 %1005, %v940
        %v1007 = vpop.permute.xlu0 %1006
        %1010 = vset.pattern.permute.xlu0 0
        %1011 = vperm.xlu0 %1010, %v941
        %v1012 = vpop.permute.xlu0 %1011
        %1015 = vset.pattern.permute.xlu0 0
        %1016 = vperm.xlu0 %1015, %v942
        %v1017 = vpop.permute.xlu0 %1016
        %1020 = vset.pattern.permute.xlu0 0
        %1021 = vperm.xlu0 %1020, %v943
        %v1022 = vpop.permute.xlu0 %1021
        %v1040 = vunpack.c.l.b16 %v904
        %v1041 = vunpack.c.l.b16 %v905
        %v1042 = vunpack.c.l.b16 %v906
        %v1043 = vunpack.c.l.b16 %v907
        %v1044 = vunpack.c.l.b16 %v908
        %v1045 = vunpack.c.l.b16 %v909
        %v1046 = vunpack.c.l.b16 %v910
        %v1047 = vunpack.c.l.b16 %v911
        %v1048 = vunpack.c.l.b16 %v912
        %v1049 = vunpack.c.l.b16 %v913
        %v1050 = vunpack.c.l.b16 %v914
        %v1051 = vunpack.c.l.b16 %v915
        %v1052 = vunpack.c.l.b16 %v916
        %v1053 = vunpack.c.l.b16 %v917
        %v1054 = vunpack.c.l.b16 %v918
        %v1055 = vunpack.c.l.b16 %v919
        %v1056 = vpack.c.b16 %v1041, %v1040
        %v1057 = vpack.c.b16 %v1043, %v1042
        %v1058 = vpack.c.b16 %v1045, %v1044
        %v1059 = vpack.c.b16 %v1047, %v1046
        %v1060 = vpack.c.b16 %v1049, %v1048
        %v1061 = vpack.c.b16 %v1051, %v1050
        %v1062 = vpack.c.b16 %v1053, %v1052
        %v1063 = vpack.c.b16 %v1055, %v1054
        %1072 = vmatprep.subr.bf16.mxu0 0
        %1073 = vmatpush1.bf16.msra.mxu0 %v927
        %1074 = vmatprep.subr.bf16.mxu0 0
        %1075 = vmatpush1.bf16.msra.mxu0 %v926
        %1076 = vmatprep.subr.bf16.mxu0 0
        %1077 = vmatpush1.bf16.msra.mxu0 %v925
        %1078 = vmatprep.subr.bf16.mxu0 0
        %1079 = vmatpush1.bf16.msra.mxu0 %v924
        %1080 = vmatprep.subr.bf16.mxu0 0
        %1081 = vmatpush1.bf16.msra.mxu0 %v923
        %1082 = vmatprep.subr.bf16.mxu0 0
        %1083 = vmatpush1.bf16.msra.mxu0 %v922
        %1084 = vmatprep.subr.bf16.mxu0 0
        %1085 = vmatpush1.bf16.msra.mxu0 %v921
        %1086 = vmatprep.subr.bf16.mxu0 0
        %1087 = vmatpush1.bf16.msra.mxu0 %v920
        %1088 = vmatprep.subr.bf16.mxu0 0
        %1089 = vmatpush2.bf16.msra.mxu0 0
        %1090 = vmatprep.subr.bf16.mxu0 0
        %1091 = vmatpush2.bf16.msra.mxu0 0
        %1092 = vmatprep.subr.bf16.mxu0 0
        %1093 = vmatpush2.bf16.msra.mxu0 0
        %1094 = vmatprep.subr.bf16.mxu0 0
        %1095 = vmatpush2.bf16.msra.mxu0 0
        %1096 = vmatprep.subr.bf16.mxu0 0
        %1097 = vmatpush2.bf16.msra.mxu0 0
        %1098 = vmatprep.subr.bf16.mxu0 0
        %1099 = vmatpush2.bf16.msra.mxu0 0
        %1100 = vmatprep.subr.bf16.mxu0 0
        %1101 = vmatpush2.bf16.msra.mxu0 0
        %1102 = vmatprep.subr.bf16.mxu0 0
        %1103 = vmatpush2.bf16.msra.mxu0 0
        %1104 = vmatprep.mubr.bf16.mxu0 0
        %1105 = vmatmul.mubr.bf16.gmra.mxu0 %v1056
        %v1106 = vpop.f32.mrf.mxu0
        %v1107 = vadd.f32 %v947, %v1106
        %v1108 = vpop.f32.mrf.mxu0
        %v1109 = vpop.f32.mrf.mxu0
        %v1110 = vadd.f32 %v952, %v1109
        %v1111 = vpop.f32.mrf.mxu0
        %1112 = vmatprep.mubr.bf16.mxu0 0
        %1113 = vmatmul.mubr.bf16.gmra.mxu0 %v1057
        %v1114 = vpop.f32.mrf.mxu0
        %v1115 = vadd.f32 %v957, %v1114
        %v1116 = vpop.f32.mrf.mxu0
        %v1117 = vpop.f32.mrf.mxu0
        %v1118 = vadd.f32 %v962, %v1117
        %v1119 = vpop.f32.mrf.mxu0
        %1120 = vmatprep.mubr.bf16.mxu0 0
        %1121 = vmatmul.mubr.bf16.gmra.mxu0 %v1058
        %v1122 = vpop.f32.mrf.mxu0
        %v1123 = vadd.f32 %v967, %v1122
        %v1124 = vpop.f32.mrf.mxu0
        %v1125 = vpop.f32.mrf.mxu0
        %v1126 = vadd.f32 %v972, %v1125
        %v1127 = vpop.f32.mrf.mxu0
        %1128 = vmatprep.mubr.bf16.mxu0 0
        %1129 = vmatmul.mubr.bf16.gmra.mxu0 %v1059
        %v1130 = vpop.f32.mrf.mxu0
        %v1131 = vadd.f32 %v977, %v1130
        %v1132 = vpop.f32.mrf.mxu0
        %v1133 = vpop.f32.mrf.mxu0
        %v1134 = vadd.f32 %v982, %v1133
        %v1135 = vpop.f32.mrf.mxu0
        %1136 = vmatprep.mubr.bf16.mxu0 0
        %1137 = vmatmul.mubr.bf16.gmra.mxu0 %v1060
        %v1138 = vpop.f32.mrf.mxu0
        %v1139 = vadd.f32 %v987, %v1138
        %v1140 = vpop.f32.mrf.mxu0
        %v1141 = vpop.f32.mrf.mxu0
        %v1142 = vadd.f32 %v992, %v1141
        %v1143 = vpop.f32.mrf.mxu0
        %1144 = vmatprep.mubr.bf16.mxu0 0
        %1145 = vmatmul.mubr.bf16.gmra.mxu0 %v1061
        %v1146 = vpop.f32.mrf.mxu0
        %v1147 = vadd.f32 %v997, %v1146
        %v1148 = vpop.f32.mrf.mxu0
        %v1149 = vpop.f32.mrf.mxu0
        %v1150 = vadd.f32 %v1002, %v1149
        %v1151 = vpop.f32.mrf.mxu0
        %1152 = vmatprep.mubr.bf16.mxu0 0
        %1153 = vmatmul.mubr.bf16.gmra.mxu0 %v1062
        %v1154 = vpop.f32.mrf.mxu0
        %v1155 = vadd.f32 %v1007, %v1154
        %v1156 = vpop.f32.mrf.mxu0
        %v1157 = vpop.f32.mrf.mxu0
        %v1158 = vadd.f32 %v1012, %v1157
        %v1159 = vpop.f32.mrf.mxu0
        %1160 = vmatprep.mubr.bf16.mxu0 0
        %1161 = vmatmul.mubr.bf16.gmra.mxu0 %v1063
        %v1162 = vpop.f32.mrf.mxu0
        %v1163 = vadd.f32 %v1017, %v1162
        %v1164 = vpop.f32.mrf.mxu0
        %v1165 = vpop.f32.mrf.mxu0
        %v1166 = vadd.f32 %v1022, %v1165
        %v1167 = vpop.f32.mrf.mxu0
        %1168 = vdwg.mxu0
        %v1169 = vunpack.c.l.bf16 %v252
        %v1170 = vunpack.c.h.bf16 %v252
        %v1171 = vunpack.c.l.bf16 %v253
        %v1172 = vunpack.c.h.bf16 %v253
        %v1173 = vunpack.c.l.bf16 %v254
        %v1174 = vunpack.c.h.bf16 %v254
        %v1175 = vunpack.c.l.bf16 %v255
        %v1176 = vunpack.c.h.bf16 %v255
        %v1177 = vunpack.c.l.bf16 %v256
        %v1178 = vunpack.c.h.bf16 %v256
        %v1179 = vunpack.c.l.bf16 %v257
        %v1180 = vunpack.c.h.bf16 %v257
        %v1181 = vunpack.c.l.bf16 %v258
        %v1182 = vunpack.c.h.bf16 %v258
        %v1183 = vunpack.c.l.bf16 %v259
        %v1184 = vunpack.c.h.bf16 %v259
        %v1185 = vunpack.c.l.bf16 %v260
        %v1186 = vunpack.c.h.bf16 %v260
        %v1187 = vunpack.c.l.bf16 %v261
        %v1188 = vunpack.c.h.bf16 %v261
        %v1189 = vunpack.c.l.bf16 %v262
        %v1190 = vunpack.c.h.bf16 %v262
        %v1191 = vunpack.c.l.bf16 %v263
        %v1192 = vunpack.c.h.bf16 %v263
        %v1193 = vunpack.c.l.bf16 %v264
        %v1194 = vunpack.c.h.bf16 %v264
        %v1195 = vunpack.c.l.bf16 %v265
        %v1196 = vunpack.c.h.bf16 %v265
        %v1197 = vunpack.c.l.bf16 %v266
        %v1198 = vunpack.c.h.bf16 %v266
        %v1199 = vunpack.c.l.bf16 %v267
        %v1200 = vunpack.c.h.bf16 %v267
        %1233 = vrot.lane.b32.xlu0 %v1169, 126
        %v1234 = vpop.permute.xlu0 %1233
        %1235 = vrot.lane.b32.xlu0 %v1170, 126
        %v1236 = vpop.permute.xlu0 %1235
        %1237 = vrot.lane.b32.xlu0 %v1171, 126
        %v1238 = vpop.permute.xlu0 %1237
        %1239 = vrot.lane.b32.xlu0 %v1172, 126
        %v1240 = vpop.permute.xlu0 %1239
        %1241 = vrot.lane.b32.xlu0 %v1173, 126
        %v1242 = vpop.permute.xlu0 %1241
        %1243 = vrot.lane.b32.xlu0 %v1174, 126
        %v1244 = vpop.permute.xlu0 %1243
        %1245 = vrot.lane.b32.xlu0 %v1175, 126
        %v1246 = vpop.permute.xlu0 %1245
        %1247 = vrot.lane.b32.xlu0 %v1176, 126
        %v1248 = vpop.permute.xlu0 %1247
        %1249 = vrot.lane.b32.xlu0 %v1177, 126
        %v1250 = vpop.permute.xlu0 %1249
        %1251 = vrot.lane.b32.xlu0 %v1178, 126
        %v1252 = vpop.permute.xlu0 %1251
        %1253 = vrot.lane.b32.xlu0 %v1179, 126
        %v1254 = vpop.permute.xlu0 %1253
        %1255 = vrot.lane.b32.xlu0 %v1180, 126
        %v1256 = vpop.permute.xlu0 %1255
        %1257 = vrot.lane.b32.xlu0 %v1181, 126
        %v1258 = vpop.permute.xlu0 %1257
        %1259 = vrot.lane.b32.xlu0 %v1182, 126
        %v1260 = vpop.permute.xlu0 %1259
        %1261 = vrot.lane.b32.xlu0 %v1183, 126
        %v1262 = vpop.permute.xlu0 %1261
        %1263 = vrot.lane.b32.xlu0 %v1184, 126
        %v1264 = vpop.permute.xlu0 %1263
        %1265 = vrot.lane.b32.xlu0 %v1185, 126
        %v1266 = vpop.permute.xlu0 %1265
        %1267 = vrot.lane.b32.xlu0 %v1186, 126
        %v1268 = vpop.permute.xlu0 %1267
        %1269 = vrot.lane.b32.xlu0 %v1187, 126
        %v1270 = vpop.permute.xlu0 %1269
        %1271 = vrot.lane.b32.xlu0 %v1188, 126
        %v1272 = vpop.permute.xlu0 %1271
        %1273 = vrot.lane.b32.xlu0 %v1189, 126
        %v1274 = vpop.permute.xlu0 %1273
        %1275 = vrot.lane.b32.xlu0 %v1190, 126
        %v1276 = vpop.permute.xlu0 %1275
        %1277 = vrot.lane.b32.xlu0 %v1191, 126
        %v1278 = vpop.permute.xlu0 %1277
        %1279 = vrot.lane.b32.xlu0 %v1192, 126
        %v1280 = vpop.permute.xlu0 %1279
        %1281 = vrot.lane.b32.xlu0 %v1193, 126
        %v1282 = vpop.permute.xlu0 %1281
        %1283 = vrot.lane.b32.xlu0 %v1194, 126
        %v1284 = vpop.permute.xlu0 %1283
        %1285 = vrot.lane.b32.xlu0 %v1195, 126
        %v1286 = vpop.permute.xlu0 %1285
        %1287 = vrot.lane.b32.xlu0 %v1196, 126
        %v1288 = vpop.permute.xlu0 %1287
        %1289 = vrot.lane.b32.xlu0 %v1197, 126
        %v1290 = vpop.permute.xlu0 %1289
        %1291 = vrot.lane.b32.xlu0 %v1198, 126
        %v1292 = vpop.permute.xlu0 %1291
        %1293 = vrot.lane.b32.xlu0 %v1199, 126
        %v1294 = vpop.permute.xlu0 %1293
        %1295 = vrot.lane.b32.xlu0 %v1200, 126
        %v1296 = vpop.permute.xlu0 %1295
        %vm1297 = vcmask 1031168
        %v1298 = vsel %vm1297, %v1234, %v1236
        %v1299 = vsel %vm1297, %v1238, %v1240
        %v1300 = vsel %vm1297, %v1242, %v1244
        %v1301 = vsel %vm1297, %v1246, %v1248
        %v1302 = vsel %vm1297, %v1250, %v1252
        %v1303 = vsel %vm1297, %v1254, %v1256
        %v1304 = vsel %vm1297, %v1258, %v1260
        %v1305 = vsel %vm1297, %v1262, %v1264
        %v1306 = vsel %vm1297, %v1266, %v1268
        %v1307 = vsel %vm1297, %v1270, %v1272
        %v1308 = vsel %vm1297, %v1274, %v1276
        %v1309 = vsel %vm1297, %v1278, %v1280
        %v1310 = vsel %vm1297, %v1282, %v1284
        %v1311 = vsel %vm1297, %v1286, %v1288
        %v1312 = vsel %vm1297, %v1290, %v1292
        %v1313 = vsel %vm1297, %v1294, %v1296
        %v1330 = vadd.f32 %v1107, %v1298
        %v1331 = vadd.f32 %v1110, %v1299
        %v1332 = vadd.f32 %v1115, %v1300
        %v1333 = vadd.f32 %v1118, %v1301
        %v1334 = vadd.f32 %v1123, %v1302
        %v1335 = vadd.f32 %v1126, %v1303
        %v1336 = vadd.f32 %v1131, %v1304
        %v1337 = vadd.f32 %v1134, %v1305
        %v1338 = vadd.f32 %v1139, %v1306
        %v1339 = vadd.f32 %v1142, %v1307
        %v1340 = vadd.f32 %v1147, %v1308
        %v1341 = vadd.f32 %v1150, %v1309
        %v1342 = vadd.f32 %v1155, %v1310
        %v1343 = vadd.f32 %v1158, %v1311
        %v1344 = vadd.f32 %v1163, %v1312
        %v1345 = vadd.f32 %v1166, %v1313
        %v1346 = vmul.f32 %v1330, 0.70710677
        %v1347 = vmul.f32 %v1331, 0.70710677
        %v1348 = vmul.f32 %v1332, 0.70710677
        %v1349 = vmul.f32 %v1333, 0.70710677
        %v1350 = vmul.f32 %v1334, 0.70710677
        %v1351 = vmul.f32 %v1335, 0.70710677
        %v1352 = vmul.f32 %v1336, 0.70710677
        %v1353 = vmul.f32 %v1337, 0.70710677
        %v1354 = vmul.f32 %v1338, 0.70710677
        %v1355 = vmul.f32 %v1339, 0.70710677
        %v1356 = vmul.f32 %v1340, 0.70710677
        %v1357 = vmul.f32 %v1341, 0.70710677
        %v1358 = vmul.f32 %v1342, 0.70710677
        %v1359 = vmul.f32 %v1343, 0.70710677
        %v1360 = vmul.f32 %v1344, 0.70710677
        %v1361 = vmul.f32 %v1345, 0.70710677
        %1362 = vst [vmem:[%s241] sm:$0xff] %v1346
        %1363 = vst [vmem:[%s241 + $0x8] sm:$0xff] %v1347
        %1364 = vst [vmem:[%s241 + $0x10] sm:$0xff] %v1348
        %1365 = vst [vmem:[%s241 + $0x18] sm:$0xff] %v1349
        %1366 = vst [vmem:[%s241 + $0x20] sm:$0xff] %v1350
        %1367 = vst [vmem:[%s241 + $0x28] sm:$0xff] %v1351
        %1368 = vst [vmem:[%s241 + $0x30] sm:$0xff] %v1352
        %1369 = vst [vmem:[%s241 + $0x38] sm:$0xff] %v1353
        %1370 = vst [vmem:[%s241 + $0x40] sm:$0xff] %v1354
        %1371 = vst [vmem:[%s241 + $0x48] sm:$0xff] %v1355
        %1372 = vst [vmem:[%s241 + $0x50] sm:$0xff] %v1356
        %1373 = vst [vmem:[%s241 + $0x58] sm:$0xff] %v1357
        %1374 = vst [vmem:[%s241 + $0x60] sm:$0xff] %v1358
        %1375 = vst [vmem:[%s241 + $0x68] sm:$0xff] %v1359
        %1376 = vst [vmem:[%s241 + $0x70] sm:$0xff] %v1360
        %1377 = vst [vmem:[%s241 + $0x78] sm:$0xff] %v1361
        %s1378 = sand.u32 %s153, 1
        %s1379 = scalar_lea.sflag [#allocation3], %s1378
        %s1380 = sand.u32 %s153, 1
        %s1381 = smul.addr %s1380, 128
        %s1382 = scalar_lea.vmem [#allocation2], %s1381
        // Predicated region
        $region41: #{residual_conv_module.1} parent=39 // pred_check
          %p1383 = pneg %p163
        $region42: #{residual_conv_module.1} parent=39 // pred_check_branch
          %1385 = sbr.rel (%p1383) target = $region44
        $region43: #{residual_conv_module.1} parent=39 // pred_region
          %s1387 = ssub.s32 2048, 2048
          %1388 = vsyncadd %s1379, %s1387
          %s1389 = smul.addr %s23, 32
          %s1390 = sadd.s32 %s24, %s1389
          %s1391 = smul.addr %s1390, 128
          %s1392 = scalar_lea.hbm %s5, %s1391
          %s1393 = sshll.u32 %s1382, 4
          %s1394 = int_to_ptr.vmem [resolvable:$true] %s1393
          %1399 = dma.vmem_to_hbm [thread:$0]  %s1394, 2048, %s1392, %s1379, 128, 256, 8
        $region44: #{residual_conv_module.1} parent=39 // pred_fallthru
          _
      $region40: #{residual_conv_module.1} parent=5 // pred_fallthru
        _
      %p1400 = scmp.le.s32.totalorder 2, %s14
      // Predicated region
      $region45: #{residual_conv_module.1} parent=5 // pred_check
        %p1401 = pneg %p1400
      $region46: #{residual_conv_module.1} parent=5 // pred_check_branch
        %1403 = sbr.rel (%p1401) target = $region48
      $region47: #{residual_conv_module.1} parent=5 // pred_region
        %s1404 = ssub.s32 %s14, 2
        // Predicated region
        $region49: #{residual_conv_module.1} parent=47 // pred_check
          %p1405 = pneg %p169
        $region50: #{residual_conv_module.1} parent=47 // pred_check_branch
          %1407 = sbr.rel (%p1405) target = $region52
        $region51: #{residual_conv_module.1} parent=47 // pred_region
          %s1408 = sand.u32 %s154, 1
          %s1409 = scalar_lea.sflag [#allocation3], %s1408
          %s1410 = sand.u32 %s154, 1
          %s1411 = smul.addr %s1410, 128
          %s1412 = scalar_lea.vmem [#allocation2], %s1411
          %1413 = dma.done %s1409, 2048
        $region52: #{residual_conv_module.1} parent=47 // pred_fallthru
          _
      $region48: #{residual_conv_module.1} parent=5 // pred_fallthru
        _
    $region6: #{residual_conv_module.1} parent=1 // loop_footer
      %s18 = sadd.s32 1, %s14
    $region7: #{residual_conv_module.1} parent=1 // loop_footer_branch
      %13 = sbr.rel target = $region3
    $region8: #{residual_conv_module.1} parent=1 // loop_exit
      _
    %1414 = vsyncpa [#allocation3], 1
    %s1415 = scalar_lea.sflag [#allocation3], 1
    %1416 = vsyncpa %s1415, 1

</llo_original>
